<compile_context>
chip_gen: v6e
topology: v6e:2x2x1
jax: 0.10.0
libtpu: 0.0.40
codegen_flags: <defaults>
</compile_context>

<pallas_src>
import jax
import jax.numpy as jnp
from jax.experimental import pallas as pl
from jax.experimental.pallas import tpu as pltpu


# ---------------------------------------------------------------------------
# Fused layer-stack kernel
# ---------------------------------------------------------------------------

def _gcn_stack_kernel(x_ref, w_ref, b_ref, adj_ref, o_ref, act_ref):
    """One grid step == one GCN layer.

    x_ref   : [N, F]   f32   padded input features (read at layer 0 only)
    w_ref   : [1, F, F] bf16 folded (BN-absorbed) weight of this layer
    b_ref   : [1, 1, F] f32  folded bias of this layer
    adj_ref : [N, N]   bf16  normalized adjacency A_hat (VMEM-resident, constant block)
    o_ref   : [N, F]   f32   output (written at the last layer only)
    act_ref : [N, F]   f32   VMEM scratch carrying the activation across layers
    """
    layer = pl.program_id(0)
    n_layers = pl.num_programs(0)

    @pl.when(layer == 0)
    def _():
        act_ref[...] = x_ref[...]

    # projection: X @ W'   (bf16 operands, f32 accumulate)
    xw = jnp.dot(act_ref[...].astype(jnp.bfloat16), w_ref[0],
                 preferred_element_type=jnp.float32)
    # propagation: A_hat @ (X @ W')  + b'
    h = jnp.dot(adj_ref[...], xw.astype(jnp.bfloat16),
                preferred_element_type=jnp.float32)
    h = h + b_ref[0]

    # hidden layers: ReLU (BN already folded into W'/b'); dropout = identity (eval)
    @pl.when(layer < n_layers - 1)
    def _():
        act_ref[...] = jnp.maximum(h, 0.0)

    # last layer: raw logits
    @pl.when(layer == n_layers - 1)
    def _():
        o_ref[...] = h.astype(o_ref.dtype)


def gcn_stack_pallas(x_pad, w_stack, b_stack, adj_bf16):
    n, feat = x_pad.shape
    n_layers = w_stack.shape[0]
    return pl.pallas_call(
        _gcn_stack_kernel,
        out_shape=jax.ShapeDtypeStruct((n, feat), jnp.float32),
        grid=(n_layers,),
        in_specs=[
            pl.BlockSpec((n, feat), lambda l: (0, 0)),        # x (constant block)
            pl.BlockSpec((1, feat, feat), lambda l: (l, 0, 0)),  # stacked weights
            pl.BlockSpec((1, 1, feat), lambda l: (l, 0, 0)),     # stacked biases
            pl.BlockSpec((n, n), lambda l: (0, 0)),           # A_hat (resident)
        ],
        out_specs=pl.BlockSpec((n, feat), lambda l: (0, 0)),
        scratch_shapes=[pltpu.VMEM((n, feat), jnp.float32)],
        compiler_params=pltpu.CompilerParams(
            dimension_semantics=("arbitrary",)),
    )(x_pad, w_stack, b_stack, adj_bf16)


# ---------------------------------------------------------------------------
# Parameter folding / padding / stacking (plain JAX, trace-time)
# ---------------------------------------------------------------------------

def _round_up(v, m):
    return ((v + m - 1) // m) * m


def _pad2d(a, rows, cols):
    r, c = a.shape
    return jnp.pad(a, ((0, rows - r), (0, cols - c)))


def fold_and_stack_params(params, feat):
    """Fold eval-mode BatchNorm into each hidden conv's W/b, zero-pad every layer
    to [feat, feat] and stack along a leading layer axis."""
    convs, bns = params["convs"], params["bns"]
    n_layers = len(convs)
    ws, bs = [], []
    for i, conv in enumerate(convs):
        W, b = conv["W"], conv["b"]                       # [fin, fout], [1, fout]
        if i < n_layers - 1:                              # hidden layers carry a BN
            bn = bns[i]
            scale = bn["gamma"] * jax.lax.rsqrt(bn["var"] + 1e-5)   # [1, fout]
            W = W * scale                                 # fold into columns of W
            b = (b - bn["mean"]) * scale + bn["beta"]
        ws.append(_pad2d(W, feat, feat))
        bs.append(_pad2d(b, 1, feat))
    w_stack = jnp.stack(ws).astype(jnp.bfloat16)          # [L, feat, feat] MXU operand
    b_stack = jnp.stack(bs)[:, None, :, :].reshape(n_layers, 1, feat)  # [L, 1, feat] f32
    return w_stack, b_stack


# ---------------------------------------------------------------------------
# Model glue: parameters, cached gcn_norm, forward
# ---------------------------------------------------------------------------

def glorot(key, shape):
    fan_in, fan_out = shape[-2], shape[-1]
    s = jnp.sqrt(6.0 / (fan_in + fan_out))
    return jax.random.uniform(key, shape, jnp.float32, -s, s)


def init_gcn_params(key, in_channels, hidden_channels, out_channels, num_layers):
    convs, bns = [], []

    def make_conv(k, fin, fout):
        k1, k2 = jax.random.split(k)
        return {"W": glorot(k1, (fin, fout)),
                "b": 0.05 * jax.random.normal(k2, (1, fout), jnp.float32)}

    def make_bn(k, f):
        k1, k2, k3, k4 = jax.random.split(k, 4)
        return {"gamma": 1.0 + 0.1 * jax.random.normal(k1, (1, f), jnp.float32),
                "beta": 0.1 * jax.random.normal(k2, (1, f), jnp.float32),
                "mean": 0.1 * jax.random.normal(k3, (1, f), jnp.float32),
                "var": 1.0 + 0.1 * jnp.abs(jax.random.normal(k4, (1, f), jnp.float32))}

    keys = jax.random.split(key, 2 * num_layers)
    convs.append(make_conv(keys[0], in_channels, hidden_channels))
    bns.append(make_bn(keys[1], hidden_channels))
    for li in range(num_layers - 2):
        convs.append(make_conv(keys[2 + 2 * li], hidden_channels, hidden_channels))
        bns.append(make_bn(keys[3 + 2 * li], hidden_channels))
    convs.append(make_conv(keys[-1], hidden_channels, out_channels))
    return {"convs": convs, "bns": bns}


def gcn_normalize(adj):
    """gcn_norm: A_hat = D^{-1/2}(A + I)D^{-1/2}.  cached=True -> computed once."""
    n = adj.shape[0]
    a = adj + jnp.eye(n, dtype=adj.dtype)
    deg = jnp.sum(a, axis=1)
    dinv = jax.lax.rsqrt(deg)
    return dinv[:, None] * a * dinv[None, :]


@jax.jit
def gcn_forward(params, x, adj_norm):
    in_channels = x.shape[1]
    hidden = params["convs"][0]["W"].shape[1]
    out_channels = params["convs"][-1]["W"].shape[1]
    feat = _round_up(max(in_channels, hidden, out_channels), 128)

    w_stack, b_stack = fold_and_stack_params(params, feat)   # BN folded, padded, stacked
    x_pad = jnp.pad(x, ((0, 0), (0, feat - in_channels)))
    adj_bf16 = adj_norm.astype(jnp.bfloat16)                 # bf16 MXU operand, cached

    out = gcn_stack_pallas(x_pad, w_stack, b_stack, adj_bf16)
    return out[:, :out_channels]


# ---------------------------------------------------------------------------
# Pure-JAX f32 reference (matches the PyTorch eval-mode forward)
# ---------------------------------------------------------------------------

def ref_gcn_forward(params, x, adj_norm):
    for i, conv in enumerate(params["convs"][:-1]):
        x = adj_norm @ (x @ conv["W"]) + conv["b"]
        bn = params["bns"][i]
        x = (x - bn["mean"]) * jax.lax.rsqrt(bn["var"] + 1e-5) * bn["gamma"] + bn["beta"]
        x = jnp.maximum(x, 0.0)
    last = params["convs"][-1]
    return adj_norm @ (x @ last["W"]) + last["b"]


# ---------------------------------------------------------------------------
# Main
# ---------------------------------------------------------------------------

if __name__ == "__main__":
    N = 128
    in_channels, hidden_channels, out_channels = 64, 128, 64
    num_layers = 3

    key = jax.random.PRNGKey(0)
    k_param, k_x, k_adj = jax.random.split(key, 3)

    params = init_gcn_params(k_param, in_channels, hidden_channels,
                             out_channels, num_layers)
    x = jax.random.normal(k_x, (N, in_channels), jnp.float32)

    # random undirected graph (symmetric, no self loops); gcn_norm adds self loops
    adj = (jax.random.uniform(k_adj, (N, N)) < 0.05).astype(jnp.float32)
    adj = jnp.maximum(adj, adj.T)
    adj = adj * (1.0 - jnp.eye(N, dtype=jnp.float32))
    adj_norm = gcn_normalize(adj)                  # cached=True -> computed once

    out = gcn_forward(params, x, adj_norm)
    out = jax.block_until_ready(out)
    assert out.shape == (N, out_channels)

    # bf16 MXU operands (f32 accumulate) vs. a pure-f32 reference -> loose-ish tol.
    ref = ref_gcn_forward(params, x, adj_norm)
    assert jnp.allclose(out, ref, rtol=3e-2, atol=3e-2), (
        float(jnp.max(jnp.abs(out - ref))))

    print("KERNEL_OK")
</pallas_src>

<mosaic_0001>
module attributes {stable_mosaic.version = 11 : i64} {
  func.func @_gcn_stack_kernel(%arg0: i32, %arg1: memref<128x128xf32, #tpu.memory_space<vmem>>, %arg2: memref<1x128x128xbf16, #tpu.memory_space<vmem>>, %arg3: memref<1x1x128xf32, #tpu.memory_space<vmem>>, %arg4: memref<128x128xbf16, #tpu.memory_space<vmem>>, %arg5: memref<128x128xf32, #tpu.memory_space<vmem>>, %arg6: memref<128x128xf32, #tpu.memory_space<vmem>>) attributes {dimension_semantics = [#tpu.dimension_semantics<arbitrary>], iteration_bounds = array<i64: 3>, scalar_prefetch = 0 : i64, scratch_operands = 1 : i64, tpu.core_type = #tpu.core_type<tc>, window_params = [{pipeline_mode = #tpu.pipeline_mode<synchronous>, transform_indices = @transform_0, window_bounds = array<i64: 128, 128>}, {transform_indices = @transform_1, window_bounds = array<i64: 1, 128, 128>}, {transform_indices = @transform_2, window_bounds = array<i64: 1, 1, 128>}, {pipeline_mode = #tpu.pipeline_mode<synchronous>, transform_indices = @transform_3, window_bounds = array<i64: 128, 128>}, {pipeline_mode = #tpu.pipeline_mode<synchronous>, transform_indices = @transform_4, window_bounds = array<i64: 128, 128>}]} {
    %c0_i32 = arith.constant 0 : i32
    %0 = arith.cmpi eq, %arg0, %c0_i32 : i32
    %1 = arith.extui %0 : i1 to i32
    %c0_i32_0 = arith.constant 0 : i32
    %2 = arith.cmpi ne, %1, %c0_i32_0 : i32
    scf.if %2 {
      %c0_14 = arith.constant 0 : index
      %c0_15 = arith.constant 0 : index
      %21 = vector.load %arg1[%c0_14, %c0_15] : memref<128x128xf32, #tpu.memory_space<vmem>>, vector<128x128xf32>
      %c0_16 = arith.constant 0 : index
      %c0_17 = arith.constant 0 : index
      %22 = vector.load %arg6[%c0_16, %c0_17] : memref<128x128xf32, #tpu.memory_space<vmem>>, vector<128x128xf32>
      tpu.vector_store %arg6[%c0_16, %c0_17], %21 {strides = array<i32>} : memref<128x128xf32, #tpu.memory_space<vmem>>, vector<128x128xf32>,
    } else {
    }
    %c0 = arith.constant 0 : index
    %c0_1 = arith.constant 0 : index
    %3 = vector.load %arg6[%c0, %c0_1] : memref<128x128xf32, #tpu.memory_space<vmem>>, vector<128x128xf32>
    %4 = arith.truncf %3 : vector<128x128xf32> to vector<128x128xbf16>
    %c0_2 = arith.constant 0 : index
    %c0_3 = arith.constant 0 : index
    %c0_4 = arith.constant 0 : index
    %5 = vector.load %arg2[%c0_2, %c0_3, %c0_4] : memref<1x128x128xbf16, #tpu.memory_space<vmem>>, vector<1x128x128xbf16>
    %6 = vector.shape_cast %5 : vector<1x128x128xbf16> to vector<128x128xbf16>
    %cst = arith.constant dense<0.000000e+00> : vector<128x128xf32>
    %7 = tpu.matmul %4, %6, %cst {dimension_numbers = #tpu.dot_dimension_numbers<[1], [0], [0], [1], [0, 0, 1, 1], [], []>} : vector<128x128xbf16>, vector<128x128xbf16>, vector<128x128xf32> -> vector<128x128xf32>
    %c0_5 = arith.constant 0 : index
    %c0_6 = arith.constant 0 : index
    %8 = vector.load %arg4[%c0_5, %c0_6] : memref<128x128xbf16, #tpu.memory_space<vmem>>, vector<128x128xbf16>
    %9 = arith.truncf %7 : vector<128x128xf32> to vector<128x128xbf16>
    %cst_7 = arith.constant dense<0.000000e+00> : vector<128x128xf32>
    %10 = tpu.matmul %8, %9, %cst_7 {dimension_numbers = #tpu.dot_dimension_numbers<[1], [0], [0], [1], [0, 0, 1, 1], [], []>} : vector<128x128xbf16>, vector<128x128xbf16>, vector<128x128xf32> -> vector<128x128xf32>
    %c0_8 = arith.constant 0 : index
    %c0_9 = arith.constant 0 : index
    %c0_10 = arith.constant 0 : index
    %11 = vector.load %arg3[%c0_8, %c0_9, %c0_10] : memref<1x1x128xf32, #tpu.memory_space<vmem>>, vector<1x1x128xf32>
    %12 = vector.shape_cast %11 : vector<1x1x128xf32> to vector<1x128xf32>
    %13 = vector.broadcast %12 : vector<1x128xf32> to vector<128x128xf32>
    %14 = arith.addf %10, %13 : vector<128x128xf32>
    %c2_i32 = arith.constant 2 : i32
    %15 = arith.cmpi slt, %arg0, %c2_i32 : i32
    %16 = arith.extui %15 : i1 to i32
    %c0_i32_11 = arith.constant 0 : i32
    %17 = arith.cmpi ne, %16, %c0_i32_11 : i32
    scf.if %17 {
      %cst_14 = arith.constant 0.000000e+00 : f32
      %21 = vector.broadcast %cst_14 : f32 to vector<128x128xf32>
      %22 = arith.maximumf %14, %21 : vector<128x128xf32>
      %c0_15 = arith.constant 0 : index
      %c0_16 = arith.constant 0 : index
      %23 = vector.load %arg6[%c0_15, %c0_16] : memref<128x128xf32, #tpu.memory_space<vmem>>, vector<128x128xf32>
      tpu.vector_store %arg6[%c0_15, %c0_16], %22 {strides = array<i32>} : memref<128x128xf32, #tpu.memory_space<vmem>>, vector<128x128xf32>,
    } else {
    }
    %c2_i32_12 = arith.constant 2 : i32
    %18 = arith.cmpi eq, %arg0, %c2_i32_12 : i32
    %19 = arith.extui %18 : i1 to i32
    %c0_i32_13 = arith.constant 0 : i32
    %20 = arith.cmpi ne, %19, %c0_i32_13 : i32
    scf.if %20 {
      %c0_14 = arith.constant 0 : index
      %c0_15 = arith.constant 0 : index
      %21 = vector.load %arg5[%c0_14, %c0_15] : memref<128x128xf32, #tpu.memory_space<vmem>>, vector<128x128xf32>
      tpu.vector_store %arg5[%c0_14, %c0_15], %14 {strides = array<i32>} : memref<128x128xf32, #tpu.memory_space<vmem>>, vector<128x128xf32>,
    } else {
    }
    return
  }
  func.func @transform_0(%arg0: i32) -> (i32, i32) {
    %c0_i32 = arith.constant 0 : i32
    %c0_i32_0 = arith.constant 0 : i32
    %c0_i32_1 = arith.constant 0 : i32
    return %c0_i32, %c0_i32_0 : i32, i32
  }
  func.func @transform_1(%arg0: i32) -> (i32, i32, i32) {
    %c0_i32 = arith.constant 0 : i32
    %c0_i32_0 = arith.constant 0 : i32
    %c0_i32_1 = arith.constant 0 : i32
    return %arg0, %c0_i32, %c0_i32_0 : i32, i32, i32
  }
  func.func @transform_2(%arg0: i32) -> (i32, i32, i32) {
    %c0_i32 = arith.constant 0 : i32
    %c0_i32_0 = arith.constant 0 : i32
    %c0_i32_1 = arith.constant 0 : i32
    return %arg0, %c0_i32, %c0_i32_0 : i32, i32, i32
  }
  func.func @transform_3(%arg0: i32) -> (i32, i32) {
    %c0_i32 = arith.constant 0 : i32
    %c0_i32_0 = arith.constant 0 : i32
    %c0_i32_1 = arith.constant 0 : i32
    return %c0_i32, %c0_i32_0 : i32, i32
  }
  func.func @transform_4(%arg0: i32) -> (i32, i32) {
    %c0_i32 = arith.constant 0 : i32
    %c0_i32_0 = arith.constant 0 : i32
    %c0_i32_1 = arith.constant 0 : i32
    return %c0_i32, %c0_i32_0 : i32, i32
  }
}

</mosaic_0001>

<llo_original>
// kernel: gcn_forward.1
$region0: #{gcn_forward.1}
  #allocation0 [shape = 'u32[]', space=smem, size = 0x4, offset = 0x4, fixed_abs, tag = 'smem constant byte address 0x4 - core index']
  #allocation1 [shape = 'u32[144,128]{1,0:T(1,128)}', space=vmem, size = 0x12000, scoped, tag = 'internal scratch']
  #allocation2 [shape = 'f32[128,128]{1,0:T(8,128)}', space=vmem, size = 0x10000, scoped, tag = 'scratch operand']
  %s0 = inlined_call_operand.vmem [shape: f32[128,128], index: 0, kind: input, shape index: {}]
  %s1 = inlined_call_operand.vmem [shape: bf16[3,128,128], index: 1, kind: input, shape index: {}]
  %s2 = inlined_call_operand.vmem [shape: f32[3,1,128], index: 2, kind: input, shape index: {}]
  %s3 = inlined_call_operand.vmem [shape: bf16[128,128], index: 3, kind: input, shape index: {}]
  %s4 = inlined_call_operand.vmem [shape: f32[128,128], index: 4, kind: output, shape index: {}]
  %s5 = sld [smem:[#allocation0]]
  $region61: #{gcn_forward.1} parent=0
    _
  %s7 = ssub.s32 1, %s5
  %s8 = scalar_select 0, %s7, %s5
  loop: start=0, step=1, limit=5
  $region2: #{gcn_forward.1} parent=0 // loop_pre_header
    _
  $region3: #{gcn_forward.1} parent=0 // loop_header
    %s10 = sphi 0, %s14
    %p11 = scmp.ge.s32.totalorder %s10, 5
    %s18 = sphi 0, %s18
    %s20 = sphi 0, %s18
    %s21 = sphi 0, %s20
    %s35 = sphi 0, %s21
    %s41 = sphi 0, %s43
    %s44 = sphi 0, %s41
    %s45 = sphi 0, %s44
    %s61 = sphi 0, %s45
    %s67 = sphi 0, %s69
    %s70 = sphi 0, %s67
    %s71 = sphi 0, %s70
    %s87 = sphi 0, %s71
    %s91 = sphi 0, %s91
    %s93 = sphi 0, %s91
    %s94 = sphi 0, %s93
    %s108 = sphi 0, %s94
    %s112 = sphi 0, %s112
    %s114 = sphi 0, %s112
    %s115 = sphi 0, %s114
    %s129 = sphi 0, %s115
  $region4: #{gcn_forward.1} parent=0 // loop_header_branch
    %13 = sbr.rel (%p11) target = $region8
  $region5: #{gcn_forward.1} parent=0 // loop_body
    %s15 = ssub.s32 %s10, 1
    %s16 = ssub.s32 %s10, 2
    %s17 = sadd.s32 %s10, 1
    %s19 = sadd.s32 %s18, 1
    %p22 = scmp.eq.s32.totalorder %s10, 2
    %p23 = scmp.ne.s32.totalorder %s18, %s20
    %p24 = scmp.eq.s32.totalorder %s10, 0
    %p25 = por %p23, %p24
    %p26 = scmp.ne.s32.totalorder %s18, %s20
    %p27 = scmp.eq.s32.totalorder %s15, 2
    %p28 = por %p26, %p27
    %p29 = scmp.ne.s32.totalorder %s20, %s21
    %p30 = scmp.eq.s32.totalorder %s15, 0
    %p31 = por %p29, %p30
    %p32 = scmp.ne.s32.totalorder %s20, %s21
    %p33 = scmp.eq.s32.totalorder %s16, 2
    %p34 = por %p32, %p33
    %p36 = scmp.ne.s32.totalorder %s21, %s35
    %p37 = scmp.eq.s32.totalorder %s16, 0
    %p38 = por %p36, %p37
    %s39 = ssub.s32 %s10, %s17
    %p40 = scmp.eq.s32.totalorder %s39, 0
    %s42 = sadd.s32 %s41, 1
    %s43 = scalar_select %p40, %s41, %s42
    %p46 = pneg %p40
    %p47 = scmp.eq.s32.totalorder %s10, 2
    %p48 = por %p46, %p47
    %p49 = scmp.ne.s32.totalorder %s41, %s44
    %p50 = scmp.eq.s32.totalorder %s10, 0
    %p51 = por %p49, %p50
    %p52 = scmp.ne.s32.totalorder %s41, %s44
    %p53 = scmp.eq.s32.totalorder %s15, 2
    %p54 = por %p52, %p53
    %p55 = scmp.ne.s32.totalorder %s44, %s45
    %p56 = scmp.eq.s32.totalorder %s15, 0
    %p57 = por %p55, %p56
    %p58 = scmp.ne.s32.totalorder %s44, %s45
    %p59 = scmp.eq.s32.totalorder %s16, 2
    %p60 = por %p58, %p59
    %p62 = scmp.ne.s32.totalorder %s45, %s61
    %p63 = scmp.eq.s32.totalorder %s16, 0
    %p64 = por %p62, %p63
    %s65 = ssub.s32 %s10, %s17
    %p66 = scmp.eq.s32.totalorder %s65, 0
    %s68 = sadd.s32 %s67, 1
    %s69 = scalar_select %p66, %s67, %s68
    %p72 = pneg %p66
    %p73 = scmp.eq.s32.totalorder %s10, 2
    %p74 = por %p72, %p73
    %p75 = scmp.ne.s32.totalorder %s67, %s70
    %p76 = scmp.eq.s32.totalorder %s10, 0
    %p77 = por %p75, %p76
    %p78 = scmp.ne.s32.totalorder %s67, %s70
    %p79 = scmp.eq.s32.totalorder %s15, 2
    %p80 = por %p78, %p79
    %p81 = scmp.ne.s32.totalorder %s70, %s71
    %p82 = scmp.eq.s32.totalorder %s15, 0
    %p83 = por %p81, %p82
    %p84 = scmp.ne.s32.totalorder %s70, %s71
    %p85 = scmp.eq.s32.totalorder %s16, 2
    %p86 = por %p84, %p85
    %p88 = scmp.ne.s32.totalorder %s71, %s87
    %p89 = scmp.eq.s32.totalorder %s16, 0
    %p90 = por %p88, %p89
    %s92 = sadd.s32 %s91, 1
    %p95 = scmp.eq.s32.totalorder %s10, 2
    %p96 = scmp.ne.s32.totalorder %s91, %s93
    %p97 = scmp.eq.s32.totalorder %s10, 0
    %p98 = por %p96, %p97
    %p99 = scmp.ne.s32.totalorder %s91, %s93
    %p100 = scmp.eq.s32.totalorder %s15, 2
    %p101 = por %p99, %p100
    %p102 = scmp.ne.s32.totalorder %s93, %s94
    %p103 = scmp.eq.s32.totalorder %s15, 0
    %p104 = por %p102, %p103
    %p105 = scmp.ne.s32.totalorder %s93, %s94
    %p106 = scmp.eq.s32.totalorder %s16, 2
    %p107 = por %p105, %p106
    %p109 = scmp.ne.s32.totalorder %s94, %s108
    %p110 = scmp.eq.s32.totalorder %s16, 0
    %p111 = por %p109, %p110
    %s113 = sadd.s32 %s112, 1
    %p116 = scmp.eq.s32.totalorder %s10, 2
    %p117 = scmp.ne.s32.totalorder %s112, %s114
    %p118 = scmp.eq.s32.totalorder %s10, 0
    %p119 = por %p117, %p118
    %p120 = scmp.ne.s32.totalorder %s112, %s114
    %p121 = scmp.eq.s32.totalorder %s15, 2
    %p122 = por %p120, %p121
    %p123 = scmp.ne.s32.totalorder %s114, %s115
    %p124 = scmp.eq.s32.totalorder %s15, 0
    %p125 = por %p123, %p124
    %p126 = scmp.ne.s32.totalorder %s114, %s115
    %p127 = scmp.eq.s32.totalorder %s16, 2
    %p128 = por %p126, %p127
    %p130 = scmp.ne.s32.totalorder %s115, %s129
    %p131 = scmp.eq.s32.totalorder %s16, 0
    %p132 = por %p130, %p131
    %p133 = scmp.le.s32.totalorder 1, %s10
    %p134 = scmp.lt.s32.totalorder %s10, 4
    %p135 = pnand %p133, %p134
    %p136 = pneg %p135
    // Predicated region
    $region9: #{gcn_forward.1} parent=5 // pred_check
      _
    $region10: #{gcn_forward.1} parent=5 // pred_check_branch
      %138 = sbr.rel (%p135) target = $region12
    $region11: #{gcn_forward.1} parent=5 // pred_region
      %s139 = ssub.s32 %s10, 1
      // Predicated region
      $region13: #{gcn_forward.1} parent=11 // pred_check
        %p140 = pneg %p31
      $region14: #{gcn_forward.1} parent=11 // pred_check_branch
        %142 = sbr.rel (%p140) target = $region16
      $region15: #{gcn_forward.1} parent=11 // pred_region
        _
      $region16: #{gcn_forward.1} parent=11 // pred_fallthru
        _
      // Predicated region
      $region17: #{gcn_forward.1} parent=11 // pred_check
        %p143 = pneg %p104
      $region18: #{gcn_forward.1} parent=11 // pred_check_branch
        %145 = sbr.rel (%p143) target = $region20
      $region19: #{gcn_forward.1} parent=11 // pred_region
        _
      $region20: #{gcn_forward.1} parent=11 // pred_fallthru
        _
    $region12: #{gcn_forward.1} parent=5 // pred_fallthru
      _
    %p146 = scmp.lt.s32.totalorder %s10, 3
    // Predicated region
    $region21: #{gcn_forward.1} parent=5 // pred_check
      %p147 = pneg %p146
    $region22: #{gcn_forward.1} parent=5 // pred_check_branch
      %149 = sbr.rel (%p147) target = $region24
    $region23: #{gcn_forward.1} parent=5 // pred_region
      // Predicated region
      $region25: #{gcn_forward.1} parent=23 // pred_check
        %p150 = pneg %p51
      $region26: #{gcn_forward.1} parent=23 // pred_check_branch
        %152 = sbr.rel (%p150) target = $region28
      $region27: #{gcn_forward.1} parent=23 // pred_region
        %p153 = scmp.lt.s32.totalorder %s10, 2
        %s154 = scalar_select %p153, %s10, 2
        %s155 = smul.addr %s154, 16
        %s156 = smul.addr %s155, 4
        %s157 = scalar_lea.vmem %s1, %s156
      $region28: #{gcn_forward.1} parent=23 // pred_fallthru
        _
      // Predicated region
      $region29: #{gcn_forward.1} parent=23 // pred_check
        %p158 = pneg %p77
      $region30: #{gcn_forward.1} parent=23 // pred_check_branch
        %160 = sbr.rel (%p158) target = $region32
      $region31: #{gcn_forward.1} parent=23 // pred_region
        %p161 = scmp.lt.s32.totalorder %s10, 2
        %s162 = scalar_select %p161, %s10, 2
        %s163 = scalar_lea.vmem %s2, %s162
      $region32: #{gcn_forward.1} parent=23 // pred_fallthru
        _
    $region24: #{gcn_forward.1} parent=5 // pred_fallthru
      _
    %p164 = scmp.le.s32.totalorder 1, %s10
    %p165 = scmp.lt.s32.totalorder %s10, 4
    %p166 = pnand %p164, %p165
    %p167 = pneg %p166
    // Predicated region
    $region33: #{gcn_forward.1} parent=5 // pred_check
      _
    $region34: #{gcn_forward.1} parent=5 // pred_check_branch
      %169 = sbr.rel (%p166) target = $region36
    $region35: #{gcn_forward.1} parent=5 // pred_region
      %s170 = ssub.s32 %s10, 1
      %p171 = pneg %p31
      %p172 = pneg %p28
      %p173 = scmp.lt.s32.totalorder %s15, 2
      %s174 = scalar_select %p173, %s15, 2
      %s175 = smul.addr %s174, 16
      %s176 = smul.addr %s175, 4
      %s177 = scalar_lea.vmem %s1, %s176
      %p178 = pneg %p57
      %p179 = pneg %p54
      %p180 = scmp.lt.s32.totalorder %s15, 2
      %s181 = scalar_select %p180, %s15, 2
      %s182 = scalar_lea.vmem %s2, %s181
      %p183 = pneg %p83
      %p184 = pneg %p80
      %p185 = pneg %p104
      %p186 = pneg %p101
      %p187 = pneg %p125
      %p188 = pneg %p122
      %p189 = scmp.lt.s32.totalorder %s15, 2
      %s190 = scalar_select %p189, %s15, 2
      %s191 = smul.addr %s190, 16
      %s192 = smul.addr %s191, 4
      %s193 = scalar_lea.vmem %s1, %s192
      %p194 = scmp.lt.s32.totalorder %s15, 2
      %s195 = scalar_select %p194, %s15, 2
      %s196 = scalar_lea.vmem %s2, %s195
      %p198 = scmp.eq.s32.totalorder %s15, 0
      // Predicated region
      $region37: #{gcn_forward.1} parent=35 // pred_check
        %p199 = pneg %p198
      $region38: #{gcn_forward.1} parent=35 // pred_check_branch
        %201 = sbr.rel (%p199) target = $region40
      $region39: #{gcn_forward.1} parent=35 // pred_region
        %v202 = vld [vmem:[%s0] sm:$0xff]
        %v203 = vld [vmem:[%s0 + $0x8] sm:$0xff]
        %v204 = vld [vmem:[%s0 + $0x10] sm:$0xff]
        %v205 = vld [vmem:[%s0 + $0x18] sm:$0xff]
        %v206 = vld [vmem:[%s0 + $0x20] sm:$0xff]
        %v207 = vld [vmem:[%s0 + $0x28] sm:$0xff]
        %v208 = vld [vmem:[%s0 + $0x30] sm:$0xff]
        %v209 = vld [vmem:[%s0 + $0x38] sm:$0xff]
        %v210 = vld [vmem:[%s0 + $0x40] sm:$0xff]
        %v211 = vld [vmem:[%s0 + $0x48] sm:$0xff]
        %v212 = vld [vmem:[%s0 + $0x50] sm:$0xff]
        %v213 = vld [vmem:[%s0 + $0x58] sm:$0xff]
        %v214 = vld [vmem:[%s0 + $0x60] sm:$0xff]
        %v215 = vld [vmem:[%s0 + $0x68] sm:$0xff]
        %v216 = vld [vmem:[%s0 + $0x70] sm:$0xff]
        %v217 = vld [vmem:[%s0 + $0x78] sm:$0xff]
        %218 = vst [vmem:[#allocation2] sm:$0xff] %v202
        %219 = vst [vmem:[#allocation2 + $0x8] sm:$0xff] %v203
        %220 = vst [vmem:[#allocation2 + $0x10] sm:$0xff] %v204
        %221 = vst [vmem:[#allocation2 + $0x18] sm:$0xff] %v205
        %222 = vst [vmem:[#allocation2 + $0x20] sm:$0xff] %v206
        %223 = vst [vmem:[#allocation2 + $0x28] sm:$0xff] %v207
        %224 = vst [vmem:[#allocation2 + $0x30] sm:$0xff] %v208
        %225 = vst [vmem:[#allocation2 + $0x38] sm:$0xff] %v209
        %226 = vst [vmem:[#allocation2 + $0x40] sm:$0xff] %v210
        %227 = vst [vmem:[#allocation2 + $0x48] sm:$0xff] %v211
        %228 = vst [vmem:[#allocation2 + $0x50] sm:$0xff] %v212
        %229 = vst [vmem:[#allocation2 + $0x58] sm:$0xff] %v213
        %230 = vst [vmem:[#allocation2 + $0x60] sm:$0xff] %v214
        %231 = vst [vmem:[#allocation2 + $0x68] sm:$0xff] %v215
        %232 = vst [vmem:[#allocation2 + $0x70] sm:$0xff] %v216
        %233 = vst [vmem:[#allocation2 + $0x78] sm:$0xff] %v217
      $region40: #{gcn_forward.1} parent=35 // pred_fallthru
        _
      %v234 = vld [vmem:[#allocation2] sm:$0xff]
      %v235 = vld [vmem:[#allocation2 + $0x8] sm:$0xff]
      %v236 = vld [vmem:[#allocation2 + $0x10] sm:$0xff]
      %v237 = vld [vmem:[#allocation2 + $0x18] sm:$0xff]
      %v238 = vld [vmem:[#allocation2 + $0x20] sm:$0xff]
      %v239 = vld [vmem:[#allocation2 + $0x28] sm:$0xff]
      %v240 = vld [vmem:[#allocation2 + $0x30] sm:$0xff]
      %v241 = vld [vmem:[#allocation2 + $0x38] sm:$0xff]
      %v242 = vld [vmem:[#allocation2 + $0x40] sm:$0xff]
      %v243 = vld [vmem:[#allocation2 + $0x48] sm:$0xff]
      %v244 = vld [vmem:[#allocation2 + $0x50] sm:$0xff]
      %v245 = vld [vmem:[#allocation2 + $0x58] sm:$0xff]
      %v246 = vld [vmem:[#allocation2 + $0x60] sm:$0xff]
      %v247 = vld [vmem:[#allocation2 + $0x68] sm:$0xff]
      %v248 = vld [vmem:[#allocation2 + $0x70] sm:$0xff]
      %v249 = vld [vmem:[#allocation2 + $0x78] sm:$0xff]
      %v250 = vpack.c.bf16 %v235, %v234
      %v251 = vpack.c.bf16 %v237, %v236
      %v252 = vpack.c.bf16 %v239, %v238
      %v253 = vpack.c.bf16 %v241, %v240
      %v254 = vpack.c.bf16 %v243, %v242
      %v255 = vpack.c.bf16 %v245, %v244
      %v256 = vpack.c.bf16 %v247, %v246
      %v257 = vpack.c.bf16 %v249, %v248
      %v258 = vld [vmem:[%s193] sm:$0xf]
      %v259 = vld [vmem:[%s193 + $0x4] sm:$0xf]
      %v260 = vld [vmem:[%s193 + $0x8] sm:$0xf]
      %v261 = vld [vmem:[%s193 + $0xc] sm:$0xf]
      %v262 = vld [vmem:[%s193 + $0x10] sm:$0xf]
      %v263 = vld [vmem:[%s193 + $0x14] sm:$0xf]
      %v264 = vld [vmem:[%s193 + $0x18] sm:$0xf]
      %v265 = vld [vmem:[%s193 + $0x1c] sm:$0xf]
      %v266 = vld [vmem:[%s193 + $0x20] sm:$0xf]
      %v267 = vld [vmem:[%s193 + $0x24] sm:$0xf]
      %v268 = vld [vmem:[%s193 + $0x28] sm:$0xf]
      %v269 = vld [vmem:[%s193 + $0x2c] sm:$0xf]
      %v270 = vld [vmem:[%s193 + $0x30] sm:$0xf]
      %v271 = vld [vmem:[%s193 + $0x34] sm:$0xf]
      %v272 = vld [vmem:[%s193 + $0x38] sm:$0xf]
      %v273 = vld [vmem:[%s193 + $0x3c] sm:$0xf]
      %v290 = vunpack.c.l.b16 %v258
      %v291 = vunpack.c.l.b16 %v259
      %v292 = vunpack.c.l.b16 %v260
      %v293 = vunpack.c.l.b16 %v261
      %v294 = vunpack.c.l.b16 %v262
      %v295 = vunpack.c.l.b16 %v263
      %v296 = vunpack.c.l.b16 %v264
      %v297 = vunpack.c.l.b16 %v265
      %v298 = vunpack.c.l.b16 %v266
      %v299 = vunpack.c.l.b16 %v267
      %v300 = vunpack.c.l.b16 %v268
      %v301 = vunpack.c.l.b16 %v269
      %v302 = vunpack.c.l.b16 %v270
      %v303 = vunpack.c.l.b16 %v271
      %v304 = vunpack.c.l.b16 %v272
      %v305 = vunpack.c.l.b16 %v273
      %v306 = vpack.c.b16 %v291, %v290
      %v307 = vpack.c.b16 %v293, %v292
      %v308 = vpack.c.b16 %v295, %v294
      %v309 = vpack.c.b16 %v297, %v296
      %v310 = vpack.c.b16 %v299, %v298
      %v311 = vpack.c.b16 %v301, %v300
      %v312 = vpack.c.b16 %v303, %v302
      %v313 = vpack.c.b16 %v305, %v304
      %322 = vmatprep.subr.bf16.mxu0 0
      %323 = vmatpush1.bf16.msra.mxu0 %v313
      %324 = vmatprep.subr.bf16.mxu0 0
      %325 = vmatpush1.bf16.msra.mxu0 %v312
      %326 = vmatprep.subr.bf16.mxu0 0
      %327 = vmatpush1.bf16.msra.mxu0 %v311
      %328 = vmatprep.subr.bf16.mxu0 0
      %329 = vmatpush1.bf16.msra.mxu0 %v310
      %330 = vmatprep.subr.bf16.mxu0 0
      %331 = vmatpush1.bf16.msra.mxu0 %v309
      %332 = vmatprep.subr.bf16.mxu0 0
      %333 = vmatpush1.bf16.msra.mxu0 %v308
      %334 = vmatprep.subr.bf16.mxu0 0
      %335 = vmatpush1.bf16.msra.mxu0 %v307
      %336 = vmatprep.subr.bf16.mxu0 0
      %337 = vmatpush1.bf16.msra.mxu0 %v306
      %338 = vmatprep.subr.bf16.mxu0 0
      %339 = vmatpush2.bf16.msra.mxu0 0
      %340 = vmatprep.subr.bf16.mxu0 0
      %341 = vmatpush2.bf16.msra.mxu0 0
      %342 = vmatprep.subr.bf16.mxu0 0
      %343 = vmatpush2.bf16.msra.mxu0 0
      %344 = vmatprep.subr.bf16.mxu0 0
      %345 = vmatpush2.bf16.msra.mxu0 0
      %346 = vmatprep.subr.bf16.mxu0 0
      %347 = vmatpush2.bf16.msra.mxu0 0
      %348 = vmatprep.subr.bf16.mxu0 0
      %349 = vmatpush2.bf16.msra.mxu0 0
      %350 = vmatprep.subr.bf16.mxu0 0
      %351 = vmatpush2.bf16.msra.mxu0 0
      %352 = vmatprep.subr.bf16.mxu0 0
      %353 = vmatpush2.bf16.msra.mxu0 0
      %354 = vmatprep.mubr.bf16.mxu0 0
      %355 = vmatmul.mubr.bf16.gmra.mxu0 %v250
      %v356 = vpop.f32.mrf.mxu0
      %v357 = vadd.f32 0.0, %v356
      %v358 = vpop.f32.mrf.mxu0
      %v359 = vpop.f32.mrf.mxu0
      %v360 = vadd.f32 0.0, %v359
      %v361 = vpop.f32.mrf.mxu0
      %362 = vmatprep.mubr.bf16.mxu0 0
      %363 = vmatmul.mubr.bf16.gmra.mxu0 %v251
      %v364 = vpop.f32.mrf.mxu0
      %v365 = vadd.f32 0.0, %v364
      %v366 = vpop.f32.mrf.mxu0
      %v367 = vpop.f32.mrf.mxu0
      %v368 = vadd.f32 0.0, %v367
      %v369 = vpop.f32.mrf.mxu0
      %370 = vmatprep.mubr.bf16.mxu0 0
      %371 = vmatmul.mubr.bf16.gmra.mxu0 %v252
      %v372 = vpop.f32.mrf.mxu0
      %v373 = vadd.f32 0.0, %v372
      %v374 = vpop.f32.mrf.mxu0
      %v375 = vpop.f32.mrf.mxu0
      %v376 = vadd.f32 0.0, %v375
      %v377 = vpop.f32.mrf.mxu0
      %378 = vmatprep.mubr.bf16.mxu0 0
      %379 = vmatmul.mubr.bf16.gmra.mxu0 %v253
      %v380 = vpop.f32.mrf.mxu0
      %v381 = vadd.f32 0.0, %v380
      %v382 = vpop.f32.mrf.mxu0
      %v383 = vpop.f32.mrf.mxu0
      %v384 = vadd.f32 0.0, %v383
      %v385 = vpop.f32.mrf.mxu0
      %386 = vmatprep.mubr.bf16.mxu0 0
      %387 = vmatmul.mubr.bf16.gmra.mxu0 %v254
      %v388 = vpop.f32.mrf.mxu0
      %v389 = vadd.f32 0.0, %v388
      %v390 = vpop.f32.mrf.mxu0
      %v391 = vpop.f32.mrf.mxu0
      %v392 = vadd.f32 0.0, %v391
      %v393 = vpop.f32.mrf.mxu0
      %394 = vmatprep.mubr.bf16.mxu0 0
      %395 = vmatmul.mubr.bf16.gmra.mxu0 %v255
      %v396 = vpop.f32.mrf.mxu0
      %v397 = vadd.f32 0.0, %v396
      %v398 = vpop.f32.mrf.mxu0
      %v399 = vpop.f32.mrf.mxu0
      %v400 = vadd.f32 0.0, %v399
      %v401 = vpop.f32.mrf.mxu0
      %402 = vmatprep.mubr.bf16.mxu0 0
      %403 = vmatmul.mubr.bf16.gmra.mxu0 %v256
      %v404 = vpop.f32.mrf.mxu0
      %v405 = vadd.f32 0.0, %v404
      %v406 = vpop.f32.mrf.mxu0
      %v407 = vpop.f32.mrf.mxu0
      %v408 = vadd.f32 0.0, %v407
      %v409 = vpop.f32.mrf.mxu0
      %410 = vmatprep.mubr.bf16.mxu0 0
      %411 = vmatmul.mubr.bf16.gmra.mxu0 %v257
      %v412 = vpop.f32.mrf.mxu0
      %v413 = vadd.f32 0.0, %v412
      %v414 = vpop.f32.mrf.mxu0
      %v415 = vpop.f32.mrf.mxu0
      %v416 = vadd.f32 0.0, %v415
      %v417 = vpop.f32.mrf.mxu0
      %418 = vdwg.mxu0
      %v419 = vld [vmem:[%s3] sm:$0xf]
      %v420 = vld [vmem:[%s3 + $0x4] sm:$0xf]
      %v421 = vld [vmem:[%s3 + $0x8] sm:$0xf]
      %v422 = vld [vmem:[%s3 + $0xc] sm:$0xf]
      %v423 = vld [vmem:[%s3 + $0x10] sm:$0xf]
      %v424 = vld [vmem:[%s3 + $0x14] sm:$0xf]
      %v425 = vld [vmem:[%s3 + $0x18] sm:$0xf]
      %v426 = vld [vmem:[%s3 + $0x1c] sm:$0xf]
      %v427 = vld [vmem:[%s3 + $0x20] sm:$0xf]
      %v428 = vld [vmem:[%s3 + $0x24] sm:$0xf]
      %v429 = vld [vmem:[%s3 + $0x28] sm:$0xf]
      %v430 = vld [vmem:[%s3 + $0x2c] sm:$0xf]
      %v431 = vld [vmem:[%s3 + $0x30] sm:$0xf]
      %v432 = vld [vmem:[%s3 + $0x34] sm:$0xf]
      %v433 = vld [vmem:[%s3 + $0x38] sm:$0xf]
      %v434 = vld [vmem:[%s3 + $0x3c] sm:$0xf]
      %v435 = vpack.c.bf16 %v360, %v357
      %v436 = vpack.c.bf16 %v368, %v365
      %v437 = vpack.c.bf16 %v376, %v373
      %v438 = vpack.c.bf16 %v384, %v381
      %v439 = vpack.c.bf16 %v392, %v389
      %v440 = vpack.c.bf16 %v400, %v397
      %v441 = vpack.c.bf16 %v408, %v405
      %v442 = vpack.c.bf16 %v416, %v413
      %v443 = vld [vmem:[%s196] sm:$0x1]
      %v445 = vlaneseq
      %v446 = vshrl.u32 %v445, 7
      %v447 = vsub.s32 0, %v446
      %v448 = vrot.slane %v443, %v447
      %v466 = vunpack.c.l.b16 %v419
      %v467 = vunpack.c.l.b16 %v420
      %v468 = vunpack.c.l.b16 %v421
      %v469 = vunpack.c.l.b16 %v422
      %v470 = vunpack.c.l.b16 %v423
      %v471 = vunpack.c.l.b16 %v424
      %v472 = vunpack.c.l.b16 %v425
      %v473 = vunpack.c.l.b16 %v426
      %v474 = vunpack.c.l.b16 %v427
      %v475 = vunpack.c.l.b16 %v428
      %v476 = vunpack.c.l.b16 %v429
      %v477 = vunpack.c.l.b16 %v430
      %v478 = vunpack.c.l.b16 %v431
      %v479 = vunpack.c.l.b16 %v432
      %v480 = vunpack.c.l.b16 %v433
      %v481 = vunpack.c.l.b16 %v434
      %v482 = vpack.c.b16 %v467, %v466
      %v483 = vpack.c.b16 %v469, %v468
      %v484 = vpack.c.b16 %v471, %v470
      %v485 = vpack.c.b16 %v473, %v472
      %v486 = vpack.c.b16 %v475, %v474
      %v487 = vpack.c.b16 %v477, %v476
      %v488 = vpack.c.b16 %v479, %v478
      %v489 = vpack.c.b16 %v481, %v480
      %498 = vmatprep.subr.bf16.mxu0 0
      %499 = vmatpush1.bf16.msra.mxu0 %v442
      %500 = vmatprep.subr.bf16.mxu0 0
      %501 = vmatpush1.bf16.msra.mxu0 %v441
      %502 = vmatprep.subr.bf16.mxu0 0
      %503 = vmatpush1.bf16.msra.mxu0 %v440
      %504 = vmatprep.subr.bf16.mxu0 0
      %505 = vmatpush1.bf16.msra.mxu0 %v439
      %506 = vmatprep.subr.bf16.mxu0 0
      %507 = vmatpush1.bf16.msra.mxu0 %v438
      %508 = vmatprep.subr.bf16.mxu0 0
      %509 = vmatpush1.bf16.msra.mxu0 %v437
      %510 = vmatprep.subr.bf16.mxu0 0
      %511 = vmatpush1.bf16.msra.mxu0 %v436
      %512 = vmatprep.subr.bf16.mxu0 0
      %513 = vmatpush1.bf16.msra.mxu0 %v435
      %514 = vmatprep.subr.bf16.mxu0 0
      %515 = vmatpush2.bf16.msra.mxu0 0
      %516 = vmatprep.subr.bf16.mxu0 0
      %517 = vmatpush2.bf16.msra.mxu0 0
      %518 = vmatprep.subr.bf16.mxu0 0
      %519 = vmatpush2.bf16.msra.mxu0 0
      %520 = vmatprep.subr.bf16.mxu0 0
      %521 = vmatpush2.bf16.msra.mxu0 0
      %522 = vmatprep.subr.bf16.mxu0 0
      %523 = vmatpush2.bf16.msra.mxu0 0
      %524 = vmatprep.subr.bf16.mxu0 0
      %525 = vmatpush2.bf16.msra.mxu0 0
      %526 = vmatprep.subr.bf16.mxu0 0
      %527 = vmatpush2.bf16.msra.mxu0 0
      %528 = vmatprep.subr.bf16.mxu0 0
      %529 = vmatpush2.bf16.msra.mxu0 0
      %530 = vmatprep.mubr.bf16.mxu0 0
      %531 = vmatmul.mubr.bf16.gmra.mxu0 %v482
      %v532 = vpop.f32.mrf.mxu0
      %v533 = vadd.f32 %v448, %v532
      %v534 = vpop.f32.mrf.mxu0
      %v535 = vpop.f32.mrf.mxu0
      %v536 = vadd.f32 %v448, %v535
      %v537 = vpop.f32.mrf.mxu0
      %538 = vmatprep.mubr.bf16.mxu0 0
      %539 = vmatmul.mubr.bf16.gmra.mxu0 %v483
      %v540 = vpop.f32.mrf.mxu0
      %v541 = vadd.f32 %v448, %v540
      %v542 = vpop.f32.mrf.mxu0
      %v543 = vpop.f32.mrf.mxu0
      %v544 = vadd.f32 %v448, %v543
      %v545 = vpop.f32.mrf.mxu0
      %546 = vmatprep.mubr.bf16.mxu0 0
      %547 = vmatmul.mubr.bf16.gmra.mxu0 %v484
      %v548 = vpop.f32.mrf.mxu0
      %v549 = vadd.f32 %v448, %v548
      %v550 = vpop.f32.mrf.mxu0
      %v551 = vpop.f32.mrf.mxu0
      %v552 = vadd.f32 %v448, %v551
      %v553 = vpop.f32.mrf.mxu0
      %554 = vmatprep.mubr.bf16.mxu0 0
      %555 = vmatmul.mubr.bf16.gmra.mxu0 %v485
      %v556 = vpop.f32.mrf.mxu0
      %v557 = vadd.f32 %v448, %v556
      %v558 = vpop.f32.mrf.mxu0
      %v559 = vpop.f32.mrf.mxu0
      %v560 = vadd.f32 %v448, %v559
      %v561 = vpop.f32.mrf.mxu0
      %562 = vmatprep.mubr.bf16.mxu0 0
      %563 = vmatmul.mubr.bf16.gmra.mxu0 %v486
      %v564 = vpop.f32.mrf.mxu0
      %v565 = vadd.f32 %v448, %v564
      %v566 = vpop.f32.mrf.mxu0
      %v567 = vpop.f32.mrf.mxu0
      %v568 = vadd.f32 %v448, %v567
      %v569 = vpop.f32.mrf.mxu0
      %570 = vmatprep.mubr.bf16.mxu0 0
      %571 = vmatmul.mubr.bf16.gmra.mxu0 %v487
      %v572 = vpop.f32.mrf.mxu0
      %v573 = vadd.f32 %v448, %v572
      %v574 = vpop.f32.mrf.mxu0
      %v575 = vpop.f32.mrf.mxu0
      %v576 = vadd.f32 %v448, %v575
      %v577 = vpop.f32.mrf.mxu0
      %578 = vmatprep.mubr.bf16.mxu0 0
      %579 = vmatmul.mubr.bf16.gmra.mxu0 %v488
      %v580 = vpop.f32.mrf.mxu0
      %v581 = vadd.f32 %v448, %v580
      %v582 = vpop.f32.mrf.mxu0
      %v583 = vpop.f32.mrf.mxu0
      %v584 = vadd.f32 %v448, %v583
      %v585 = vpop.f32.mrf.mxu0
      %586 = vmatprep.mubr.bf16.mxu0 0
      %587 = vmatmul.mubr.bf16.gmra.mxu0 %v489
      %v588 = vpop.f32.mrf.mxu0
      %v589 = vadd.f32 %v448, %v588
      %v590 = vpop.f32.mrf.mxu0
      %v591 = vpop.f32.mrf.mxu0
      %v592 = vadd.f32 %v448, %v591
      %v593 = vpop.f32.mrf.mxu0
      %594 = vdwg.mxu0
      %p595 = scmp.lt.s32.totalorder %s15, 2
      // Predicated region
      $region41: #{gcn_forward.1} parent=35 // pred_check
        %p596 = pneg %p595
      $region42: #{gcn_forward.1} parent=35 // pred_check_branch
        %598 = sbr.rel (%p596) target = $region44
      $region43: #{gcn_forward.1} parent=35 // pred_region
        %v599 = vmax.f32 %v533, 0.0
        %v600 = vmax.f32 %v536, 0.0
        %v601 = vmax.f32 %v541, 0.0
        %v602 = vmax.f32 %v544, 0.0
        %v603 = vmax.f32 %v549, 0.0
        %v604 = vmax.f32 %v552, 0.0
        %v605 = vmax.f32 %v557, 0.0
        %v606 = vmax.f32 %v560, 0.0
        %v607 = vmax.f32 %v565, 0.0
        %v608 = vmax.f32 %v568, 0.0
        %v609 = vmax.f32 %v573, 0.0
        %v610 = vmax.f32 %v576, 0.0
        %v611 = vmax.f32 %v581, 0.0
        %v612 = vmax.f32 %v584, 0.0
        %v613 = vmax.f32 %v589, 0.0
        %v614 = vmax.f32 %v592, 0.0
        %615 = vst [vmem:[#allocation2] sm:$0xff] %v599
        %616 = vst [vmem:[#allocation2 + $0x8] sm:$0xff] %v600
        %617 = vst [vmem:[#allocation2 + $0x10] sm:$0xff] %v601
        %618 = vst [vmem:[#allocation2 + $0x18] sm:$0xff] %v602
        %619 = vst [vmem:[#allocation2 + $0x20] sm:$0xff] %v603
        %620 = vst [vmem:[#allocation2 + $0x28] sm:$0xff] %v604
        %621 = vst [vmem:[#allocation2 + $0x30] sm:$0xff] %v605
        %622 = vst [vmem:[#allocation2 + $0x38] sm:$0xff] %v606
        %623 = vst [vmem:[#allocation2 + $0x40] sm:$0xff] %v607
        %624 = vst [vmem:[#allocation2 + $0x48] sm:$0xff] %v608
        %625 = vst [vmem:[#allocation2 + $0x50] sm:$0xff] %v609
        %626 = vst [vmem:[#allocation2 + $0x58] sm:$0xff] %v610
        %627 = vst [vmem:[#allocation2 + $0x60] sm:$0xff] %v611
        %628 = vst [vmem:[#allocation2 + $0x68] sm:$0xff] %v612
        %629 = vst [vmem:[#allocation2 + $0x70] sm:$0xff] %v613
        %630 = vst [vmem:[#allocation2 + $0x78] sm:$0xff] %v614
      $region44: #{gcn_forward.1} parent=35 // pred_fallthru
        _
      %p631 = scmp.eq.s32.totalorder %s15, 2
      // Predicated region
      $region45: #{gcn_forward.1} parent=35 // pred_check
        %p632 = pneg %p631
      $region46: #{gcn_forward.1} parent=35 // pred_check_branch
        %634 = sbr.rel (%p632) target = $region48
      $region47: #{gcn_forward.1} parent=35 // pred_region
        %635 = vst [vmem:[%s4] sm:$0xff] %v533
        %636 = vst [vmem:[%s4 + $0x8] sm:$0xff] %v536
        %637 = vst [vmem:[%s4 + $0x10] sm:$0xff] %v541
        %638 = vst [vmem:[%s4 + $0x18] sm:$0xff] %v544
        %639 = vst [vmem:[%s4 + $0x20] sm:$0xff] %v549
        %640 = vst [vmem:[%s4 + $0x28] sm:$0xff] %v552
        %641 = vst [vmem:[%s4 + $0x30] sm:$0xff] %v557
        %642 = vst [vmem:[%s4 + $0x38] sm:$0xff] %v560
        %643 = vst [vmem:[%s4 + $0x40] sm:$0xff] %v565
        %644 = vst [vmem:[%s4 + $0x48] sm:$0xff] %v568
        %645 = vst [vmem:[%s4 + $0x50] sm:$0xff] %v573
        %646 = vst [vmem:[%s4 + $0x58] sm:$0xff] %v576
        %647 = vst [vmem:[%s4 + $0x60] sm:$0xff] %v581
        %648 = vst [vmem:[%s4 + $0x68] sm:$0xff] %v584
        %649 = vst [vmem:[%s4 + $0x70] sm:$0xff] %v589
        %650 = vst [vmem:[%s4 + $0x78] sm:$0xff] %v592
      $region48: #{gcn_forward.1} parent=35 // pred_fallthru
        _
      // Predicated region
      $region49: #{gcn_forward.1} parent=35 // pred_check
        %p651 = pneg %p122
      $region50: #{gcn_forward.1} parent=35 // pred_check_branch
        %653 = sbr.rel (%p651) target = $region52
      $region51: #{gcn_forward.1} parent=35 // pred_region
        _
      $region52: #{gcn_forward.1} parent=35 // pred_fallthru
        _
      // Predicated region
      $region53: #{gcn_forward.1} parent=35 // pred_check
        %p654 = pneg %p122
      $region54: #{gcn_forward.1} parent=35 // pred_check_branch
        %656 = sbr.rel (%p654) target = $region56
      $region55: #{gcn_forward.1} parent=35 // pred_region
        _
      $region56: #{gcn_forward.1} parent=35 // pred_fallthru
        _
    $region36: #{gcn_forward.1} parent=5 // pred_fallthru
      _
    %p657 = scmp.le.s32.totalorder 2, %s10
    // Predicated region
    $region57: #{gcn_forward.1} parent=5 // pred_check
      %p658 = pneg %p657
    $region58: #{gcn_forward.1} parent=5 // pred_check_branch
      %660 = sbr.rel (%p658) target = $region60
    $region59: #{gcn_forward.1} parent=5 // pred_region
      %s661 = ssub.s32 %s10, 2
    $region60: #{gcn_forward.1} parent=5 // pred_fallthru
      _
  $region6: #{gcn_forward.1} parent=0 // loop_footer
    %s14 = sadd.s32 1, %s10
  $region7: #{gcn_forward.1} parent=0 // loop_footer_branch
    %9 = sbr.rel target = $region3
  $region8: #{gcn_forward.1} parent=0 // loop_exit
    _

</llo_original>
